<compile_context>
chip_gen: v5e
topology: v5e:2x2
jax: 0.10.0
libtpu: 0.0.40
codegen_flags: <defaults>
</compile_context>

<pallas_src>
import functools

import jax
import jax.numpy as jnp
from jax.experimental import pallas as pl
from jax.experimental.pallas import tpu as pltpu

LANE = 128  # lane width; feature dims are padded to multiples of this


def _round_up(v, m):
    return (v + m - 1) // m * m


def _cdiv(a, b):
    return (a + b - 1) // b


def _pad2(a, rows, cols):
    if a.shape == (rows, cols):
        return a
    return jnp.pad(a, ((0, rows - a.shape[0]), (0, cols - a.shape[1])))


def _vmem_limit_bytes():
    """~80% of physical per-core VMEM; conservative 64 MiB fallback (v7x)."""
    try:
        phys = int(pltpu.get_tpu_info().vmem_capacity_bytes)
    except Exception:
        phys = 64 << 20
    return max(32 << 20, int(phys * 0.8))


# ---------------------------------------------------------------------------
# Kernels (generated per static (beta, has_shortcut) config)
# ---------------------------------------------------------------------------
def _make_act(beta):
    if beta > 0:
        beta = float(beta)
        inv_beta = 1.0 / beta

        def act(v):  # torch.nn.Softplus(beta, threshold=20)
            v32 = v.astype(jnp.float32)
            bv = beta * v32
            sp = inv_beta * jnp.log(1.0 + jnp.exp(jnp.minimum(bv, 20.0)))
            return jnp.where(bv > 20.0, v32, sp).astype(v.dtype)
    else:

        def act(v):  # ReLU, in the operand's native dtype (bf16 stays bf16)
            return jnp.maximum(v, 0)

    return act


@functools.lru_cache(maxsize=None)
def _get_kernel(beta, has_shortcut):
    act = _make_act(beta)

    if has_shortcut:

        def kernel(x_ref, w0_ref, b0_ref, w1_ref, b1_ref, ws_ref, o_ref):
            net = jnp.dot(act(x_ref[...]), w0_ref[...],
                          preferred_element_type=jnp.float32) + b0_ref[...]
            h2 = act(net).astype(w1_ref.dtype)
            dx = jnp.dot(h2, w1_ref[...],
                         preferred_element_type=jnp.float32) + b1_ref[...]
            # Re-read x for the shortcut matmul (don't pin x live across the
            # two matmuls above).
            x_s = jnp.dot(x_ref[...], ws_ref[...],
                          preferred_element_type=jnp.float32)
            o_ref[...] = (x_s + dx).astype(o_ref.dtype)
    else:

        def kernel(x_ref, w0_ref, b0_ref, w1_ref, b1_ref, o_ref):
            net = jnp.dot(act(x_ref[...]), w0_ref[...],
                          preferred_element_type=jnp.float32) + b0_ref[...]
            h2 = act(net).astype(w1_ref.dtype)
            dx = jnp.dot(h2, w1_ref[...],
                         preferred_element_type=jnp.float32) + b1_ref[...]
            # Re-read x at the residual add instead of keeping it live.
            o_ref[...] = (x_ref[...].astype(jnp.float32) + dx).astype(o_ref.dtype)

    return kernel


# ---------------------------------------------------------------------------
# Parameter preparation (done ONCE, off the forward path)
# ---------------------------------------------------------------------------
def prepare_params(w0_t, b0, w1_t, b1, ws_t=None, *, compute_dtype=None):
    """Pad (in, out)-layout weights to lane multiples once.

    w0_t: (size_in, size_h), b0: (1, size_h), w1_t: (size_h, size_out),
    b1: (1, size_out), ws_t: (size_in, size_out) or None (identity shortcut).
    compute_dtype (e.g. jnp.bfloat16) optionally casts matmul operands for the
    fast MXU path (accumulation stays f32).
    """
    size_in, size_h = w0_t.shape
    size_out = w1_t.shape[1]
    if ws_t is None:
        assert size_in == size_out, "identity shortcut requires size_in == size_out"
    in_pad, h_pad, out_pad = (_round_up(d, LANE) for d in (size_in, size_h, size_out))

    def prep(a, r, c):
        if compute_dtype is not None:
            a = a.astype(compute_dtype)
        return _pad2(a, r, c)

    return dict(
        w0=prep(w0_t, in_pad, h_pad),
        b0=prep(b0, 1, h_pad),
        w1=prep(w1_t, h_pad, out_pad),
        b1=prep(b1, 1, out_pad),
        ws=None if ws_t is None else prep(ws_t, in_pad, out_pad),
        size_in=size_in,
        size_out=size_out,
    )


# ---------------------------------------------------------------------------
# Forward
# ---------------------------------------------------------------------------
def resnet_block_fc(x, params, *, beta=0.0, tile_m=1024):
    """x: (..., size_in); params from prepare_params(). Output: (..., size_out)."""
    w0, b0, w1, b1, ws = params["w0"], params["b0"], params["w1"], params["b1"], params["ws"]
    size_in, size_out = params["size_in"], params["size_out"]
    in_pad, h_pad = w0.shape
    out_pad = w1.shape[1]

    orig_shape = x.shape
    orig_dtype = x.dtype
    assert orig_shape[-1] == size_in
    x2 = x.reshape(-1, size_in)
    n = x2.shape[0]

    # Matmul operands run in the prepared weight dtype; output keeps x's dtype.
    cdtype = w0.dtype
    if x2.dtype != cdtype:
        x2 = x2.astype(cdtype)
    # Feature (lane) axis zero pad only — exact; the batch axis stays ragged
    # (Pallas masks the ragged last block on read/write).
    if in_pad != size_in:
        x2 = jnp.pad(x2, ((0, 0), (0, in_pad - size_in)))

    itemsize = x2.dtype.itemsize
    sublane = 16 if cdtype == jnp.bfloat16 else 8

    vmem_limit = _vmem_limit_bytes()

    # Single-buffered resident weights/biases.
    w_arrays = (w0, b0, w1, b1) + ((ws,) if ws is not None else ())
    w_bytes = sum(a.size * a.dtype.itemsize for a in w_arrays)

    # Per-row VMEM: double-buffered x/out tiles + rough f32 intermediates.
    per_row = 2 * (in_pad + out_pad) * itemsize + 4 * (in_pad + 2 * h_pad + 3 * out_pad)
    avail = max(vmem_limit - w_bytes - (4 << 20), per_row * sublane)
    vmem_tile = max(sublane, (avail // per_row) // sublane * sublane)
    split_tile = _round_up(_cdiv(n, 2), sublane)  # >= 2 grid steps (v7x megacore)
    tile = max(sublane, min(_round_up(tile_m, sublane), vmem_tile, split_tile))

    grid = (_cdiv(n, tile),)
    buf1 = pl.Buffered(1)  # grid-invariant blocks: single VMEM buffer

    in_specs = [
        pl.BlockSpec((tile, in_pad), lambda i: (i, 0)),
        pl.BlockSpec((in_pad, h_pad), lambda i: (0, 0), pipeline_mode=buf1),
        pl.BlockSpec((1, h_pad), lambda i: (0, 0), pipeline_mode=buf1),
        pl.BlockSpec((h_pad, out_pad), lambda i: (0, 0), pipeline_mode=buf1),
        pl.BlockSpec((1, out_pad), lambda i: (0, 0), pipeline_mode=buf1),
    ]
    args = [x2, w0, b0, w1, b1]
    if ws is not None:
        in_specs.append(pl.BlockSpec((in_pad, out_pad), lambda i: (0, 0), pipeline_mode=buf1))
        args.append(ws)
    out_spec = pl.BlockSpec((tile, out_pad), lambda i: (i, 0))

    kernel = _get_kernel(float(beta), ws is not None)

    out = pl.pallas_call(
        kernel,
        out_shape=jax.ShapeDtypeStruct((n, out_pad), orig_dtype),
        grid_spec=pltpu.PrefetchScalarGridSpec(
            num_scalar_prefetch=0,
            grid=grid,
            in_specs=in_specs,
            out_specs=out_spec,
        ),
        compiler_params=pltpu.CompilerParams(
            dimension_semantics=("parallel",),  # batch axis shards across TCs
            vmem_limit_bytes=vmem_limit,
        ),
    )(*args)

    if out_pad != size_out:
        out = out[:, :size_out]
    return out.reshape(orig_shape[:-1] + (size_out,))


# ---------------------------------------------------------------------------
# Faithful torch-style init + pure-JAX reference
# ---------------------------------------------------------------------------
def init_params(key, size_in, size_out=None, size_h=None, dtype=jnp.float32):
    """Mirrors the PyTorch __init__ (kaiming fc_0 / shortcut, zero fc_1).
    Returns pre-transposed (in, out) weights; ws_t is None for identity."""
    if size_out is None:
        size_out = size_in
    if size_h is None:
        size_h = min(size_in, size_out)
    k0, ks = jax.random.split(key)
    w0 = jax.random.normal(k0, (size_h, size_in), dtype) * jnp.sqrt(2.0 / size_in)
    b0 = jnp.zeros((1, size_h), dtype)
    w1_t = jnp.zeros((size_h, size_out), dtype)   # fc_1 weight zeroed in torch init
    b1 = jnp.zeros((1, size_out), dtype)
    ws_t = None
    if size_in != size_out:
        ws = jax.random.normal(ks, (size_out, size_in), dtype) * jnp.sqrt(2.0 / size_in)
        ws_t = ws.T
    return w0.T, b0, w1_t, b1, ws_t


def reference(x, w0_t, b0, w1_t, b1, ws_t=None, beta=0.0):
    if beta > 0:
        def act(v):
            bv = beta * v
            return jnp.where(bv > 20.0, v,
                             (1.0 / beta) * jnp.log(1.0 + jnp.exp(jnp.minimum(bv, 20.0))))
    else:
        def act(v):
            return jnp.maximum(v, 0.0)
    net = act(x) @ w0_t + b0
    dx = act(net) @ w1_t + b1
    x_s = x @ ws_t if ws_t is not None else x
    return x_s + dx


# ---------------------------------------------------------------------------
# Demo / self-check
# ---------------------------------------------------------------------------
if __name__ == "__main__":
    key = jax.random.PRNGKey(0)
    k = jax.random.split(key, 8)

    # Case 1: size_in != size_out -> learned linear shortcut (ReLU, f32).
    LEAD, IN0, H0, OUT0 = (2, 24), 32, 32, 48
    x0 = jax.random.normal(k[0], LEAD + (IN0,), jnp.float32)
    w0_t = jax.random.normal(k[1], (IN0, H0), jnp.float32) * (2.0 / IN0) ** 0.5
    b0 = jax.random.normal(k[2], (1, H0), jnp.float32) * 0.1
    w1_t = jax.random.normal(k[3], (H0, OUT0), jnp.float32) * (2.0 / H0) ** 0.5
    b1 = jax.random.normal(k[4], (1, OUT0), jnp.float32) * 0.1
    ws_t = jax.random.normal(k[5], (IN0, OUT0), jnp.float32) * (2.0 / IN0) ** 0.5

    params0 = prepare_params(w0_t, b0, w1_t, b1, ws_t)
    out0 = jax.block_until_ready(resnet_block_fc(x0, params0))
    ref0 = reference(x0.reshape(-1, IN0), w0_t, b0, w1_t, b1, ws_t).reshape(LEAD + (OUT0,))
    assert out0.shape == LEAD + (OUT0,)
    assert jnp.allclose(out0, ref0, atol=1e-4, rtol=1e-4), "relu shortcut path mismatch"

    # Case 2: identity shortcut, torch-faithful init, ragged batch (n=40).
    N1, IN1 = 40, 64
    x1 = jax.random.normal(k[6], (N1, IN1), jnp.float32)
    raw1 = init_params(k[7], IN1)
    params1 = prepare_params(*raw1)
    out1 = jax.block_until_ready(resnet_block_fc(x1, params1))
    ref1 = reference(x1, *raw1)
    assert jnp.allclose(out1, ref1, atol=1e-4, rtol=1e-4), "identity path mismatch"

    # Case 3: Softplus activation (beta > 0).
    out2 = jax.block_until_ready(resnet_block_fc(x0, params0, beta=2.0))
    ref2 = reference(x0.reshape(-1, IN0), w0_t, b0, w1_t, b1, ws_t,
                     beta=2.0).reshape(LEAD + (OUT0,))
    assert jnp.allclose(out2, ref2, atol=1e-4, rtol=1e-4), "softplus path mismatch"

    # Case 4: opt-in bf16 compute dtype (fast MXU path, f32 accumulation).
    params_bf = prepare_params(w0_t, b0, w1_t, b1, ws_t, compute_dtype=jnp.bfloat16)
    outb = jax.block_until_ready(resnet_block_fc(x0.astype(jnp.bfloat16), params_bf))
    assert jnp.allclose(outb.astype(jnp.float32), ref0, atol=0.1, rtol=0.1), "bf16 path mismatch"

    print("KERNEL_OK")
</pallas_src>

<mosaic_0001>
module attributes {stable_mosaic.version = 11 : i64} {
  func.func @kernel(%arg0: i32, %arg1: memref<24x128xf32, #tpu.memory_space<vmem>>, %arg2: memref<128x128xf32, #tpu.memory_space<vmem>>, %arg3: memref<1x128xf32, #tpu.memory_space<vmem>>, %arg4: memref<128x128xf32, #tpu.memory_space<vmem>>, %arg5: memref<1x128xf32, #tpu.memory_space<vmem>>, %arg6: memref<128x128xf32, #tpu.memory_space<vmem>>, %arg7: memref<24x128xf32, #tpu.memory_space<vmem>>) attributes {dimension_semantics = [#tpu.dimension_semantics<parallel>], iteration_bounds = array<i64: 2>, scalar_prefetch = 0 : i64, scratch_operands = 0 : i64, tpu.core_type = #tpu.core_type<tc>, window_params = [{transform_indices = @transform_0, window_bounds = array<i64: 24, 128>}, {pipeline_mode = #tpu.pipeline_mode<synchronous>, transform_indices = @transform_1, window_bounds = array<i64: 128, 128>}, {pipeline_mode = #tpu.pipeline_mode<synchronous>, transform_indices = @transform_2, window_bounds = array<i64: 1, 128>}, {pipeline_mode = #tpu.pipeline_mode<synchronous>, transform_indices = @transform_3, window_bounds = array<i64: 128, 128>}, {pipeline_mode = #tpu.pipeline_mode<synchronous>, transform_indices = @transform_4, window_bounds = array<i64: 1, 128>}, {pipeline_mode = #tpu.pipeline_mode<synchronous>, transform_indices = @transform_5, window_bounds = array<i64: 128, 128>}, {transform_indices = @transform_6, window_bounds = array<i64: 24, 128>}]} {
    %c0 = arith.constant 0 : index
    %c0_0 = arith.constant 0 : index
    %0 = vector.load %arg1[%c0, %c0_0] : memref<24x128xf32, #tpu.memory_space<vmem>>, vector<24x128xf32>
    %cst = arith.constant 0.000000e+00 : f32
    %1 = vector.broadcast %cst : f32 to vector<24x128xf32>
    %2 = arith.maximumf %0, %1 : vector<24x128xf32>
    %c0_1 = arith.constant 0 : index
    %c0_2 = arith.constant 0 : index
    %3 = vector.load %arg2[%c0_1, %c0_2] : memref<128x128xf32, #tpu.memory_space<vmem>>, vector<128x128xf32>
    %cst_3 = arith.constant dense<0.000000e+00> : vector<24x128xf32>
    %4 = tpu.matmul %2, %3, %cst_3 {dimension_numbers = #tpu.dot_dimension_numbers<[1], [0], [0], [1], [0, 0, 1, 1], [], []>} : vector<24x128xf32>, vector<128x128xf32>, vector<24x128xf32> -> vector<24x128xf32>
    %c0_4 = arith.constant 0 : index
    %c0_5 = arith.constant 0 : index
    %5 = vector.load %arg3[%c0_4, %c0_5] : memref<1x128xf32, #tpu.memory_space<vmem>>, vector<1x128xf32>
    %6 = vector.broadcast %5 : vector<1x128xf32> to vector<24x128xf32>
    %7 = arith.addf %4, %6 : vector<24x128xf32>
    %cst_6 = arith.constant 0.000000e+00 : f32
    %8 = vector.broadcast %cst_6 : f32 to vector<24x128xf32>
    %9 = arith.maximumf %7, %8 : vector<24x128xf32>
    %c0_7 = arith.constant 0 : index
    %c0_8 = arith.constant 0 : index
    %10 = vector.load %arg4[%c0_7, %c0_8] : memref<128x128xf32, #tpu.memory_space<vmem>>, vector<128x128xf32>
    %cst_9 = arith.constant dense<0.000000e+00> : vector<24x128xf32>
    %11 = tpu.matmul %9, %10, %cst_9 {dimension_numbers = #tpu.dot_dimension_numbers<[1], [0], [0], [1], [0, 0, 1, 1], [], []>} : vector<24x128xf32>, vector<128x128xf32>, vector<24x128xf32> -> vector<24x128xf32>
    %c0_10 = arith.constant 0 : index
    %c0_11 = arith.constant 0 : index
    %12 = vector.load %arg5[%c0_10, %c0_11] : memref<1x128xf32, #tpu.memory_space<vmem>>, vector<1x128xf32>
    %13 = vector.broadcast %12 : vector<1x128xf32> to vector<24x128xf32>
    %14 = arith.addf %11, %13 : vector<24x128xf32>
    %c0_12 = arith.constant 0 : index
    %c0_13 = arith.constant 0 : index
    %15 = vector.load %arg1[%c0_12, %c0_13] : memref<24x128xf32, #tpu.memory_space<vmem>>, vector<24x128xf32>
    %c0_14 = arith.constant 0 : index
    %c0_15 = arith.constant 0 : index
    %16 = vector.load %arg6[%c0_14, %c0_15] : memref<128x128xf32, #tpu.memory_space<vmem>>, vector<128x128xf32>
    %cst_16 = arith.constant dense<0.000000e+00> : vector<24x128xf32>
    %17 = tpu.matmul %15, %16, %cst_16 {dimension_numbers = #tpu.dot_dimension_numbers<[1], [0], [0], [1], [0, 0, 1, 1], [], []>} : vector<24x128xf32>, vector<128x128xf32>, vector<24x128xf32> -> vector<24x128xf32>
    %18 = arith.addf %17, %14 : vector<24x128xf32>
    %c0_17 = arith.constant 0 : index
    %c0_18 = arith.constant 0 : index
    %19 = vector.load %arg7[%c0_17, %c0_18] : memref<24x128xf32, #tpu.memory_space<vmem>>, vector<24x128xf32>
    tpu.vector_store %arg7[%c0_17, %c0_18], %18 {strides = array<i32>} : memref<24x128xf32, #tpu.memory_space<vmem>>, vector<24x128xf32>,
    return
  }
  func.func @transform_0(%arg0: i32) -> (i32, i32) {
    %c0_i32 = arith.constant 0 : i32
    %c0_i32_0 = arith.constant 0 : i32
    return %arg0, %c0_i32 : i32, i32
  }
  func.func @transform_1(%arg0: i32) -> (i32, i32) {
    %c0_i32 = arith.constant 0 : i32
    %c0_i32_0 = arith.constant 0 : i32
    %c0_i32_1 = arith.constant 0 : i32
    return %c0_i32, %c0_i32_0 : i32, i32
  }
  func.func @transform_2(%arg0: i32) -> (i32, i32) {
    %c0_i32 = arith.constant 0 : i32
    %c0_i32_0 = arith.constant 0 : i32
    %c0_i32_1 = arith.constant 0 : i32
    return %c0_i32, %c0_i32_0 : i32, i32
  }
  func.func @transform_3(%arg0: i32) -> (i32, i32) {
    %c0_i32 = arith.constant 0 : i32
    %c0_i32_0 = arith.constant 0 : i32
    %c0_i32_1 = arith.constant 0 : i32
    return %c0_i32, %c0_i32_0 : i32, i32
  }
  func.func @transform_4(%arg0: i32) -> (i32, i32) {
    %c0_i32 = arith.constant 0 : i32
    %c0_i32_0 = arith.constant 0 : i32
    %c0_i32_1 = arith.constant 0 : i32
    return %c0_i32, %c0_i32_0 : i32, i32
  }
  func.func @transform_5(%arg0: i32) -> (i32, i32) {
    %c0_i32 = arith.constant 0 : i32
    %c0_i32_0 = arith.constant 0 : i32
    %c0_i32_1 = arith.constant 0 : i32
    return %c0_i32, %c0_i32_0 : i32, i32
  }
  func.func @transform_6(%arg0: i32) -> (i32, i32) {
    %c0_i32 = arith.constant 0 : i32
    %c0_i32_0 = arith.constant 0 : i32
    return %arg0, %c0_i32 : i32, i32
  }
}

</mosaic_0001>

<llo_original>
// kernel: tpu_custom_call.1
$region0: #{tpu_custom_call.1}
  #allocation0 [shape = 'u32[]', space=smem, size = 0x4, offset = 0x4, fixed_abs, tag = 'smem constant byte address 0x4 - core index']
  #allocation1 [shape = 'u32[72,128]{1,0:T(1,128)}', space=vmem, size = 0x9000, scoped, tag = 'internal scratch']
  %s0 = inlined_call_operand.hbm [shape: f32[48,128], index: 0, kind: input, shape index: {}]
  %s1 = inlined_call_operand.hbm [shape: f32[128,128], index: 1, kind: input, shape index: {}]
  %s2 = inlined_call_operand.vmem [shape: f32[1,128], index: 2, kind: input, shape index: {}]
  %s3 = inlined_call_operand.hbm [shape: f32[128,128], index: 3, kind: input, shape index: {}]
  %s4 = inlined_call_operand.vmem [shape: f32[1,128], index: 4, kind: input, shape index: {}]
  %s5 = inlined_call_operand.hbm [shape: f32[128,128], index: 5, kind: input, shape index: {}]
  %s6 = inlined_call_operand.hbm [shape: f32[48,128], index: 6, kind: output, shape index: {}]
  %s7 = sld [smem:[#allocation0]]
  $region73: #{tpu_custom_call.1} parent=0
    _
  %s9 = ssub.s32 1, %s7
  %s10 = scalar_select 0, %s9, %s7
  $region1: #{tpu_custom_call.1} parent=0
    #allocation2 [shape = 'u8[24576]{0}', space=vmem, size = 0x6000, scoped, tag = 'input window, operand 0']
    #allocation3 [shape = 's32[2]{0}', space=sflag, size = 0x8, scoped, tag = 'scoped memory for tpu_custom_call.1']
    #allocation4 [shape = 's32[2]{0}', space=sflag, size = 0x8, scoped, tag = 'scoped memory for tpu_custom_call.1']
    #allocation5 [shape = 'u8[65536]{0}', space=vmem, size = 0x10000, scoped, tag = 'input window, operand 1, single buffered']
    #allocation6 [shape = 's32[1]{0}', space=sflag, size = 0x4, scoped, tag = 'scoped memory for tpu_custom_call.1']
    #allocation7 [shape = 'u8[65536]{0}', space=vmem, size = 0x10000, scoped, tag = 'input window, operand 3, single buffered']
    #allocation8 [shape = 'u8[65536]{0}', space=vmem, size = 0x10000, scoped, tag = 'input window, operand 5, single buffered']
    #allocation9 [shape = 's32[1]{0}', space=sflag, size = 0x4, scoped, tag = 'scoped memory for tpu_custom_call.1']
    #allocation10 [shape = 'u8[24576]{0}', space=vmem, size = 0x6000, scoped, tag = 'output window, operand 0']
    %11 = vsyncpa [#allocation3], 0
    %s12 = scalar_lea.sflag [#allocation3], 1
    %13 = vsyncpa %s12, 0
    %14 = vsyncpa [#allocation6], 0
    %15 = vsyncpa [#allocation9], 0
    %16 = vsyncpa [#allocation4], 0
    %s17 = scalar_lea.sflag [#allocation4], 1
    %18 = vsyncpa %s17, 0
    loop: start=0, step=1, limit=4
    $region2: #{tpu_custom_call.1} parent=1 // loop_pre_header
      _
    $region3: #{tpu_custom_call.1} parent=1 // loop_header
      %s20 = sphi 0, %s24
      %p21 = scmp.ge.s32.totalorder %s20, 4
      %s30 = sphi 0, %s32
      %s33 = sphi 0, %s30
      %s34 = sphi 0, %s33
      %s50 = sphi 0, %s34
      %s54 = sphi 0, %s54
      %s56 = sphi 0, %s54
      %s57 = sphi 0, %s56
      %s71 = sphi 0, %s57
      %s75 = sphi 0, %s75
      %s77 = sphi 0, %s75
      %s78 = sphi 0, %s77
      %s92 = sphi 0, %s78
      %s96 = sphi 0, %s96
      %s98 = sphi 0, %s96
      %s99 = sphi 0, %s98
      %s113 = sphi 0, %s99
      %s117 = sphi 0, %s117
      %s119 = sphi 0, %s117
      %s120 = sphi 0, %s119
      %s134 = sphi 0, %s120
      %s138 = sphi 0, %s138
      %s140 = sphi 0, %s138
      %s141 = sphi 0, %s140
      %s155 = sphi 0, %s141
      %s161 = sphi 0, %s163
      %s164 = sphi 0, %s161
      %s165 = sphi 0, %s164
      %s181 = sphi 0, %s165
    $region4: #{tpu_custom_call.1} parent=1 // loop_header_branch
      %23 = sbr.rel (%p21) target = $region8
    $region5: #{tpu_custom_call.1} parent=1 // loop_body
      %s25 = ssub.s32 %s20, 1
      %s26 = ssub.s32 %s20, 2
      %s27 = sadd.s32 %s20, 1
      %s28 = ssub.s32 %s20, %s27
      %p29 = scmp.eq.s32.totalorder %s28, 0
      %s31 = sadd.s32 %s30, 1
      %s32 = scalar_select %p29, %s30, %s31
      %p35 = pneg %p29
      %p36 = scmp.eq.s32.totalorder %s20, 1
      %p37 = por %p35, %p36
      %p38 = scmp.ne.s32.totalorder %s30, %s33
      %p39 = scmp.eq.s32.totalorder %s20, 0
      %p40 = por %p38, %p39
      %p41 = scmp.ne.s32.totalorder %s30, %s33
      %p42 = scmp.eq.s32.totalorder %s25, 1
      %p43 = por %p41, %p42
      %p44 = scmp.ne.s32.totalorder %s33, %s34
      %p45 = scmp.eq.s32.totalorder %s25, 0
      %p46 = por %p44, %p45
      %p47 = scmp.ne.s32.totalorder %s33, %s34
      %p48 = scmp.eq.s32.totalorder %s26, 1
      %p49 = por %p47, %p48
      %p51 = scmp.ne.s32.totalorder %s34, %s50
      %p52 = scmp.eq.s32.totalorder %s26, 0
      %p53 = por %p51, %p52
      %s55 = sadd.s32 %s54, 1
      %p58 = scmp.eq.s32.totalorder %s20, 1
      %p59 = scmp.ne.s32.totalorder %s54, %s56
      %p60 = scmp.eq.s32.totalorder %s20, 0
      %p61 = por %p59, %p60
      %p62 = scmp.ne.s32.totalorder %s54, %s56
      %p63 = scmp.eq.s32.totalorder %s25, 1
      %p64 = por %p62, %p63
      %p65 = scmp.ne.s32.totalorder %s56, %s57
      %p66 = scmp.eq.s32.totalorder %s25, 0
      %p67 = por %p65, %p66
      %p68 = scmp.ne.s32.totalorder %s56, %s57
      %p69 = scmp.eq.s32.totalorder %s26, 1
      %p70 = por %p68, %p69
      %p72 = scmp.ne.s32.totalorder %s57, %s71
      %p73 = scmp.eq.s32.totalorder %s26, 0
      %p74 = por %p72, %p73
      %s76 = sadd.s32 %s75, 1
      %p79 = scmp.eq.s32.totalorder %s20, 1
      %p80 = scmp.ne.s32.totalorder %s75, %s77
      %p81 = scmp.eq.s32.totalorder %s20, 0
      %p82 = por %p80, %p81
      %p83 = scmp.ne.s32.totalorder %s75, %s77
      %p84 = scmp.eq.s32.totalorder %s25, 1
      %p85 = por %p83, %p84
      %p86 = scmp.ne.s32.totalorder %s77, %s78
      %p87 = scmp.eq.s32.totalorder %s25, 0
      %p88 = por %p86, %p87
      %p89 = scmp.ne.s32.totalorder %s77, %s78
      %p90 = scmp.eq.s32.totalorder %s26, 1
      %p91 = por %p89, %p90
      %p93 = scmp.ne.s32.totalorder %s78, %s92
      %p94 = scmp.eq.s32.totalorder %s26, 0
      %p95 = por %p93, %p94
      %s97 = sadd.s32 %s96, 1
      %p100 = scmp.eq.s32.totalorder %s20, 1
      %p101 = scmp.ne.s32.totalorder %s96, %s98
      %p102 = scmp.eq.s32.totalorder %s20, 0
      %p103 = por %p101, %p102
      %p104 = scmp.ne.s32.totalorder %s96, %s98
      %p105 = scmp.eq.s32.totalorder %s25, 1
      %p106 = por %p104, %p105
      %p107 = scmp.ne.s32.totalorder %s98, %s99
      %p108 = scmp.eq.s32.totalorder %s25, 0
      %p109 = por %p107, %p108
      %p110 = scmp.ne.s32.totalorder %s98, %s99
      %p111 = scmp.eq.s32.totalorder %s26, 1
      %p112 = por %p110, %p111
      %p114 = scmp.ne.s32.totalorder %s99, %s113
      %p115 = scmp.eq.s32.totalorder %s26, 0
      %p116 = por %p114, %p115
      %s118 = sadd.s32 %s117, 1
      %p121 = scmp.eq.s32.totalorder %s20, 1
      %p122 = scmp.ne.s32.totalorder %s117, %s119
      %p123 = scmp.eq.s32.totalorder %s20, 0
      %p124 = por %p122, %p123
      %p125 = scmp.ne.s32.totalorder %s117, %s119
      %p126 = scmp.eq.s32.totalorder %s25, 1
      %p127 = por %p125, %p126
      %p128 = scmp.ne.s32.totalorder %s119, %s120
      %p129 = scmp.eq.s32.totalorder %s25, 0
      %p130 = por %p128, %p129
      %p131 = scmp.ne.s32.totalorder %s119, %s120
      %p132 = scmp.eq.s32.totalorder %s26, 1
      %p133 = por %p131, %p132
      %p135 = scmp.ne.s32.totalorder %s120, %s134
      %p136 = scmp.eq.s32.totalorder %s26, 0
      %p137 = por %p135, %p136
      %s139 = sadd.s32 %s138, 1
      %p142 = scmp.eq.s32.totalorder %s20, 1
      %p143 = scmp.ne.s32.totalorder %s138, %s140
      %p144 = scmp.eq.s32.totalorder %s20, 0
      %p145 = por %p143, %p144
      %p146 = scmp.ne.s32.totalorder %s138, %s140
      %p147 = scmp.eq.s32.totalorder %s25, 1
      %p148 = por %p146, %p147
      %p149 = scmp.ne.s32.totalorder %s140, %s141
      %p150 = scmp.eq.s32.totalorder %s25, 0
      %p151 = por %p149, %p150
      %p152 = scmp.ne.s32.totalorder %s140, %s141
      %p153 = scmp.eq.s32.totalorder %s26, 1
      %p154 = por %p152, %p153
      %p156 = scmp.ne.s32.totalorder %s141, %s155
      %p157 = scmp.eq.s32.totalorder %s26, 0
      %p158 = por %p156, %p157
      %s159 = ssub.s32 %s20, %s27
      %p160 = scmp.eq.s32.totalorder %s159, 0
      %s162 = sadd.s32 %s161, 1
      %s163 = scalar_select %p160, %s161, %s162
      %p166 = pneg %p160
      %p167 = scmp.eq.s32.totalorder %s20, 1
      %p168 = por %p166, %p167
      %p169 = scmp.ne.s32.totalorder %s161, %s164
      %p170 = scmp.eq.s32.totalorder %s20, 0
      %p171 = por %p169, %p170
      %p172 = scmp.ne.s32.totalorder %s161, %s164
      %p173 = scmp.eq.s32.totalorder %s25, 1
      %p174 = por %p172, %p173
      %p175 = scmp.ne.s32.totalorder %s164, %s165
      %p176 = scmp.eq.s32.totalorder %s25, 0
      %p177 = por %p175, %p176
      %p178 = scmp.ne.s32.totalorder %s164, %s165
      %p179 = scmp.eq.s32.totalorder %s26, 1
      %p180 = por %p178, %p179
      %p182 = scmp.ne.s32.totalorder %s165, %s181
      %p183 = scmp.eq.s32.totalorder %s26, 0
      %p184 = por %p182, %p183
      %p185 = scmp.le.s32.totalorder 1, %s20
      %p186 = scmp.lt.s32.totalorder %s20, 3
      %p187 = pnand %p185, %p186
      %p188 = pneg %p187
      // Predicated region
      $region9: #{tpu_custom_call.1} parent=5 // pred_check
        _
      $region10: #{tpu_custom_call.1} parent=5 // pred_check_branch
        %190 = sbr.rel (%p187) target = $region12
      $region11: #{tpu_custom_call.1} parent=5 // pred_region
        %s191 = ssub.s32 %s20, 1
        // Predicated region
        $region13: #{tpu_custom_call.1} parent=11 // pred_check
          %p192 = pneg %p67
        $region14: #{tpu_custom_call.1} parent=11 // pred_check_branch
          %194 = sbr.rel (%p192) target = $region16
        $region15: #{tpu_custom_call.1} parent=11 // pred_region
          %196 = vsyncadd [#allocation6], 0
          %s197 = sshll.u32 %s1, 4
          %s198 = int_to_ptr.hbm [resolvable:$true] %s197
          %s199 = sshll.u32 [#allocation5], 4
          %s200 = int_to_ptr.vmem [resolvable:$true] %s199
          %205 = dma.hbm_to_vmem [thread:$0]  %s198, 2048, %s200, [#allocation6], 128, 128, 8
        $region16: #{tpu_custom_call.1} parent=11 // pred_fallthru
          _
        // Predicated region
        $region17: #{tpu_custom_call.1} parent=11 // pred_check
          %p206 = pneg %p88
        $region18: #{tpu_custom_call.1} parent=11 // pred_check_branch
          %208 = sbr.rel (%p206) target = $region20
        $region19: #{tpu_custom_call.1} parent=11 // pred_region
          _
        $region20: #{tpu_custom_call.1} parent=11 // pred_fallthru
          _
        // Predicated region
        $region21: #{tpu_custom_call.1} parent=11 // pred_check
          %p209 = pneg %p109
        $region22: #{tpu_custom_call.1} parent=11 // pred_check_branch
          %211 = sbr.rel (%p209) target = $region24
        $region23: #{tpu_custom_call.1} parent=11 // pred_region
          %213 = vsyncadd [#allocation6], 0
          %s214 = sshll.u32 %s3, 4
          %s215 = int_to_ptr.hbm [resolvable:$true] %s214
          %s216 = sshll.u32 [#allocation7], 4
          %s217 = int_to_ptr.vmem [resolvable:$true] %s216
          %222 = dma.hbm_to_vmem [thread:$0]  %s215, 2048, %s217, [#allocation6], 128, 128, 8
        $region24: #{tpu_custom_call.1} parent=11 // pred_fallthru
          _
        // Predicated region
        $region25: #{tpu_custom_call.1} parent=11 // pred_check
          %p223 = pneg %p130
        $region26: #{tpu_custom_call.1} parent=11 // pred_check_branch
          %225 = sbr.rel (%p223) target = $region28
        $region27: #{tpu_custom_call.1} parent=11 // pred_region
          _
        $region28: #{tpu_custom_call.1} parent=11 // pred_fallthru
          _
        // Predicated region
        $region29: #{tpu_custom_call.1} parent=11 // pred_check
          %p226 = pneg %p151
        $region30: #{tpu_custom_call.1} parent=11 // pred_check_branch
          %228 = sbr.rel (%p226) target = $region32
        $region31: #{tpu_custom_call.1} parent=11 // pred_region
          %230 = vsyncadd [#allocation9], 0
          %s231 = sshll.u32 %s5, 4
          %s232 = int_to_ptr.hbm [resolvable:$true] %s231
          %s233 = sshll.u32 [#allocation8], 4
          %s234 = int_to_ptr.vmem [resolvable:$true] %s233
          %239 = dma.hbm_to_vmem [thread:$0]  %s232, 2048, %s234, [#allocation9], 128, 128, 8
        $region32: #{tpu_custom_call.1} parent=11 // pred_fallthru
          _
      $region12: #{tpu_custom_call.1} parent=5 // pred_fallthru
        _
      %p240 = scmp.lt.s32.totalorder %s20, 2
      // Predicated region
      $region33: #{tpu_custom_call.1} parent=5 // pred_check
        %p241 = pneg %p240
      $region34: #{tpu_custom_call.1} parent=5 // pred_check_branch
        %243 = sbr.rel (%p241) target = $region36
      $region35: #{tpu_custom_call.1} parent=5 // pred_region
        // Predicated region
        $region37: #{tpu_custom_call.1} parent=35 // pred_check
          %p244 = pneg %p40
        $region38: #{tpu_custom_call.1} parent=35 // pred_check_branch
          %246 = sbr.rel (%p244) target = $region40
        $region39: #{tpu_custom_call.1} parent=35 // pred_region
          %s247 = sand.u32 %s30, 1
          %s248 = scalar_lea.sflag [#allocation3], %s247
          %s249 = sand.u32 %s30, 1
          %s250 = smul.addr %s249, 24
          %s251 = scalar_lea.vmem [#allocation2], %s250
          %s252 = smul.u32 3, %s20
          %254 = vsyncadd %s248, 0
          %s255 = smul.addr %s252, 8
          %s256 = scalar_lea.hbm %s0, %s255
          %s257 = sshll.u32 %s256, 4
          %s258 = int_to_ptr.hbm [resolvable:$true] %s257
          %s259 = sshll.u32 %s251, 4
          %s260 = int_to_ptr.vmem [resolvable:$true] %s259
          %265 = dma.hbm_to_vmem [thread:$0]  %s258, 384, %s260, %s248, 128, 128, 8
        $region40: #{tpu_custom_call.1} parent=35 // pred_fallthru
          _
      $region36: #{tpu_custom_call.1} parent=5 // pred_fallthru
        _
      %p266 = scmp.le.s32.totalorder 1, %s20
      %p267 = scmp.lt.s32.totalorder %s20, 3
      %p268 = pnand %p266, %p267
      %p269 = pneg %p268
      // Predicated region
      $region41: #{tpu_custom_call.1} parent=5 // pred_check
        _
      $region42: #{tpu_custom_call.1} parent=5 // pred_check_branch
        %271 = sbr.rel (%p268) target = $region44
      $region43: #{tpu_custom_call.1} parent=5 // pred_region
        %s272 = ssub.s32 %s20, 1
        %s273 = sand.u32 %s33, 1
        %s274 = scalar_lea.sflag [#allocation3], %s273
        %s275 = sand.u32 %s33, 1
        %s276 = smul.addr %s275, 24
        %s277 = scalar_lea.vmem [#allocation2], %s276
        // Predicated region
        $region45: #{tpu_custom_call.1} parent=43 // pred_check
          %p278 = pneg %p46
        $region46: #{tpu_custom_call.1} parent=43 // pred_check_branch
          %280 = sbr.rel (%p278) target = $region48
        $region47: #{tpu_custom_call.1} parent=43 // pred_region
          %282 = dma.done %s274, 384
        $region48: #{tpu_custom_call.1} parent=43 // pred_fallthru
          _
        // Predicated region
        $region49: #{tpu_custom_call.1} parent=43 // pred_check
          %p283 = pneg %p67
        $region50: #{tpu_custom_call.1} parent=43 // pred_check_branch
          %285 = sbr.rel (%p283) target = $region52
        $region51: #{tpu_custom_call.1} parent=43 // pred_region
          %287 = dma.done [#allocation6], 2048
        $region52: #{tpu_custom_call.1} parent=43 // pred_fallthru
          _
        // Predicated region
        $region53: #{tpu_custom_call.1} parent=43 // pred_check
          %p288 = pneg %p109
        $region54: #{tpu_custom_call.1} parent=43 // pred_check_branch
          %290 = sbr.rel (%p288) target = $region56
        $region55: #{tpu_custom_call.1} parent=43 // pred_region
          %292 = dma.done [#allocation6], 2048
        $region56: #{tpu_custom_call.1} parent=43 // pred_fallthru
          _
        // Predicated region
        $region57: #{tpu_custom_call.1} parent=43 // pred_check
          %p293 = pneg %p151
        $region58: #{tpu_custom_call.1} parent=43 // pred_check_branch
          %295 = sbr.rel (%p293) target = $region60
        $region59: #{tpu_custom_call.1} parent=43 // pred_region
          %297 = dma.done [#allocation9], 2048
        $region60: #{tpu_custom_call.1} parent=43 // pred_fallthru
          _
        %s298 = sand.u32 %s33, 1
        %s299 = scalar_lea.sflag [#allocation3], %s298
        %s300 = sand.u32 %s33, 1
        %s301 = smul.addr %s300, 24
        %s302 = scalar_lea.vmem [#allocation2], %s301
        %p303 = pneg %p46
        %p304 = pneg %p43
        %p305 = pneg %p67
        %p306 = pneg %p64
        %p307 = pneg %p88
        %p308 = pneg %p85
        %p309 = pneg %p109
        %p310 = pneg %p106
        %p311 = pneg %p130
        %p312 = pneg %p127
        %p313 = pneg %p151
        %p314 = pneg %p148
        %p315 = pneg %p177
        %p316 = pneg %p174
        %s317 = sand.u32 %s164, 1
        %s318 = scalar_lea.sflag [#allocation4], %s317
        %s319 = sand.u32 %s164, 1
        %s320 = smul.addr %s319, 24
        %s321 = scalar_lea.vmem [#allocation10], %s320
        %s322 = smul.u32 3, %s25
        %s323 = smul.u32 3, %s25
        %v324 = vld [vmem:[%s277] sm:$0xff]
        %v325 = vld [vmem:[%s277 + $0x8] sm:$0xff]
        %v326 = vld [vmem:[%s277 + $0x10] sm:$0xff]
        %v327 = vmax.f32 %v324, 0.0
        %v328 = vmax.f32 %v325, 0.0
        %v329 = vmax.f32 %v326, 0.0
        %v330 = vld [vmem:[#allocation5] sm:$0xff]
        %v331 = vld [vmem:[#allocation5 + $0x8] sm:$0xff]
        %v332 = vld [vmem:[#allocation5 + $0x10] sm:$0xff]
        %v333 = vld [vmem:[#allocation5 + $0x18] sm:$0xff]
        %v334 = vld [vmem:[#allocation5 + $0x20] sm:$0xff]
        %v335 = vld [vmem:[#allocation5 + $0x28] sm:$0xff]
        %v336 = vld [vmem:[#allocation5 + $0x30] sm:$0xff]
        %v337 = vld [vmem:[#allocation5 + $0x38] sm:$0xff]
        %v338 = vld [vmem:[#allocation5 + $0x40] sm:$0xff]
        %v339 = vld [vmem:[#allocation5 + $0x48] sm:$0xff]
        %v340 = vld [vmem:[#allocation5 + $0x50] sm:$0xff]
        %v341 = vld [vmem:[#allocation5 + $0x58] sm:$0xff]
        %v342 = vld [vmem:[#allocation5 + $0x60] sm:$0xff]
        %v343 = vld [vmem:[#allocation5 + $0x68] sm:$0xff]
        %v344 = vld [vmem:[#allocation5 + $0x70] sm:$0xff]
        %v345 = vld [vmem:[#allocation5 + $0x78] sm:$0xff]
        %v346 = vld [vmem:[%s2] sm:$0x1]
        %v348 = vperm.slane %v346, 0
        %350 = vmatpush.msra.mxu0 %v345
        %351 = vmatpush.msra.mxu0 %v344
        %352 = vmatpush.msra.mxu0 %v343
        %353 = vmatpush.msra.mxu0 %v342
        %354 = vmatpush.msra.mxu0 %v341
        %355 = vmatpush.msra.mxu0 %v340
        %356 = vmatpush.msra.mxu0 %v339
        %357 = vmatpush.msra.mxu0 %v338
        %358 = vmatpush.msra.mxu0 %v337
        %359 = vmatpush.msra.mxu0 %v336
        %360 = vmatpush.msra.mxu0 %v335
        %361 = vmatpush.msra.mxu0 %v334
        %362 = vmatpush.msra.mxu0 %v333
        %363 = vmatpush.msra.mxu0 %v332
        %364 = vmatpush.msra.mxu0 %v331
        %365 = vmatpush.msra.mxu0 %v330
        %366 = vmatmul.f32.gmra.mxu0 %v327
        %v367 = vpop.f32.mrf.mxu0
        %v368 = vadd.f32 %v348, %v367
        %369 = vmatmul.f32.gmra.mxu0 %v328
        %v370 = vpop.f32.mrf.mxu0
        %v371 = vadd.f32 %v348, %v370
        %372 = vmatmul.f32.gmra.mxu0 %v329
        %v373 = vpop.f32.mrf.mxu0
        %v374 = vadd.f32 %v348, %v373
        %375 = vdwg.mxu0
        %v376 = vmax.f32 %v368, 0.0
        %v377 = vmax.f32 %v371, 0.0
        %v378 = vmax.f32 %v374, 0.0
        %v379 = vld [vmem:[#allocation7] sm:$0xff]
        %v380 = vld [vmem:[#allocation7 + $0x8] sm:$0xff]
        %v381 = vld [vmem:[#allocation7 + $0x10] sm:$0xff]
        %v382 = vld [vmem:[#allocation7 + $0x18] sm:$0xff]
        %v383 = vld [vmem:[#allocation7 + $0x20] sm:$0xff]
        %v384 = vld [vmem:[#allocation7 + $0x28] sm:$0xff]
        %v385 = vld [vmem:[#allocation7 + $0x30] sm:$0xff]
        %v386 = vld [vmem:[#allocation7 + $0x38] sm:$0xff]
        %v387 = vld [vmem:[#allocation7 + $0x40] sm:$0xff]
        %v388 = vld [vmem:[#allocation7 + $0x48] sm:$0xff]
        %v389 = vld [vmem:[#allocation7 + $0x50] sm:$0xff]
        %v390 = vld [vmem:[#allocation7 + $0x58] sm:$0xff]
        %v391 = vld [vmem:[#allocation7 + $0x60] sm:$0xff]
        %v392 = vld [vmem:[#allocation7 + $0x68] sm:$0xff]
        %v393 = vld [vmem:[#allocation7 + $0x70] sm:$0xff]
        %v394 = vld [vmem:[#allocation7 + $0x78] sm:$0xff]
        %v395 = vld [vmem:[%s4] sm:$0x1]
        %v397 = vperm.slane %v395, 0
        %399 = vmatpush.msra.mxu0 %v394
        %400 = vmatpush.msra.mxu0 %v393
        %401 = vmatpush.msra.mxu0 %v392
        %402 = vmatpush.msra.mxu0 %v391
        %403 = vmatpush.msra.mxu0 %v390
        %404 = vmatpush.msra.mxu0 %v389
        %405 = vmatpush.msra.mxu0 %v388
        %406 = vmatpush.msra.mxu0 %v387
        %407 = vmatpush.msra.mxu0 %v386
        %408 = vmatpush.msra.mxu0 %v385
        %409 = vmatpush.msra.mxu0 %v384
        %410 = vmatpush.msra.mxu0 %v383
        %411 = vmatpush.msra.mxu0 %v382
        %412 = vmatpush.msra.mxu0 %v381
        %413 = vmatpush.msra.mxu0 %v380
        %414 = vmatpush.msra.mxu0 %v379
        %415 = vmatmul.f32.gmra.mxu0 %v376
        %v416 = vpop.f32.mrf.mxu0
        %v417 = vadd.f32 %v397, %v416
        %418 = vmatmul.f32.gmra.mxu0 %v377
        %v419 = vpop.f32.mrf.mxu0
        %v420 = vadd.f32 %v397, %v419
        %421 = vmatmul.f32.gmra.mxu0 %v378
        %v422 = vpop.f32.mrf.mxu0
        %v423 = vadd.f32 %v397, %v422
        %424 = vdwg.mxu0
        %v425 = vld [vmem:[#allocation8] sm:$0xff]
        %v426 = vld [vmem:[#allocation8 + $0x8] sm:$0xff]
        %v427 = vld [vmem:[#allocation8 + $0x10] sm:$0xff]
        %v428 = vld [vmem:[#allocation8 + $0x18] sm:$0xff]
        %v429 = vld [vmem:[#allocation8 + $0x20] sm:$0xff]
        %v430 = vld [vmem:[#allocation8 + $0x28] sm:$0xff]
        %v431 = vld [vmem:[#allocation8 + $0x30] sm:$0xff]
        %v432 = vld [vmem:[#allocation8 + $0x38] sm:$0xff]
        %v433 = vld [vmem:[#allocation8 + $0x40] sm:$0xff]
        %v434 = vld [vmem:[#allocation8 + $0x48] sm:$0xff]
        %v435 = vld [vmem:[#allocation8 + $0x50] sm:$0xff]
        %v436 = vld [vmem:[#allocation8 + $0x58] sm:$0xff]
        %v437 = vld [vmem:[#allocation8 + $0x60] sm:$0xff]
        %v438 = vld [vmem:[#allocation8 + $0x68] sm:$0xff]
        %v439 = vld [vmem:[#allocation8 + $0x70] sm:$0xff]
        %v440 = vld [vmem:[#allocation8 + $0x78] sm:$0xff]
        %441 = vmatpush.msra.mxu0 %v440
        %442 = vmatpush.msra.mxu0 %v439
        %443 = vmatpush.msra.mxu0 %v438
        %444 = vmatpush.msra.mxu0 %v437
        %445 = vmatpush.msra.mxu0 %v436
        %446 = vmatpush.msra.mxu0 %v435
        %447 = vmatpush.msra.mxu0 %v434
        %448 = vmatpush.msra.mxu0 %v433
        %449 = vmatpush.msra.mxu0 %v432
        %450 = vmatpush.msra.mxu0 %v431
        %451 = vmatpush.msra.mxu0 %v430
        %452 = vmatpush.msra.mxu0 %v429
        %453 = vmatpush.msra.mxu0 %v428
        %454 = vmatpush.msra.mxu0 %v427
        %455 = vmatpush.msra.mxu0 %v426
        %456 = vmatpush.msra.mxu0 %v425
        %457 = vmatmul.f32.gmra.mxu0 %v324
        %v458 = vpop.f32.mrf.mxu0
        %v459 = vadd.f32 %v417, %v458
        %460 = vmatmul.f32.gmra.mxu0 %v325
        %v461 = vpop.f32.mrf.mxu0
        %v462 = vadd.f32 %v420, %v461
        %463 = vmatmul.f32.gmra.mxu0 %v326
        %v464 = vpop.f32.mrf.mxu0
        %v465 = vadd.f32 %v423, %v464
        %466 = vdwg.mxu0
        %467 = vst [vmem:[%s321] sm:$0xff] %v459
        %468 = vst [vmem:[%s321 + $0x8] sm:$0xff] %v462
        %469 = vst [vmem:[%s321 + $0x10] sm:$0xff] %v465
        %s470 = sand.u32 %s164, 1
        %s471 = scalar_lea.sflag [#allocation4], %s470
        %s472 = sand.u32 %s164, 1
        %s473 = smul.addr %s472, 24
        %s474 = scalar_lea.vmem [#allocation10], %s473
        // Predicated region
        $region61: #{tpu_custom_call.1} parent=43 // pred_check
          %p475 = pneg %p174
        $region62: #{tpu_custom_call.1} parent=43 // pred_check_branch
          %477 = sbr.rel (%p475) target = $region64
        $region63: #{tpu_custom_call.1} parent=43 // pred_region
          %s478 = smul.u32 3, %s25
          %480 = vsyncadd %s471, 0
          %s481 = smul.addr %s478, 8
          %s482 = scalar_lea.hbm %s6, %s481
          %s483 = sshll.u32 %s474, 4
          %s484 = int_to_ptr.vmem [resolvable:$true] %s483
          %s485 = sshll.u32 %s482, 4
          %s486 = int_to_ptr.hbm [resolvable:$true] %s485
          %491 = dma.vmem_to_hbm [thread:$0]  %s484, 384, %s486, %s471, 128, 128, 8
        $region64: #{tpu_custom_call.1} parent=43 // pred_fallthru
          _
      $region44: #{tpu_custom_call.1} parent=5 // pred_fallthru
        _
      %p492 = scmp.le.s32.totalorder 2, %s20
      // Predicated region
      $region65: #{tpu_custom_call.1} parent=5 // pred_check
        %p493 = pneg %p492
      $region66: #{tpu_custom_call.1} parent=5 // pred_check_branch
        %495 = sbr.rel (%p493) target = $region68
      $region67: #{tpu_custom_call.1} parent=5 // pred_region
        %s496 = ssub.s32 %s20, 2
        // Predicated region
        $region69: #{tpu_custom_call.1} parent=67 // pred_check
          %p497 = pneg %p180
        $region70: #{tpu_custom_call.1} parent=67 // pred_check_branch
          %499 = sbr.rel (%p497) target = $region72
        $region71: #{tpu_custom_call.1} parent=67 // pred_region
          %s500 = sand.u32 %s165, 1
          %s501 = scalar_lea.sflag [#allocation4], %s500
          %s502 = sand.u32 %s165, 1
          %s503 = smul.addr %s502, 24
          %s504 = scalar_lea.vmem [#allocation10], %s503
          %506 = dma.done %s501, 384
        $region72: #{tpu_custom_call.1} parent=67 // pred_fallthru
          _
      $region68: #{tpu_custom_call.1} parent=5 // pred_fallthru
        _
    $region6: #{tpu_custom_call.1} parent=1 // loop_footer
      %s24 = sadd.s32 1, %s20
    $region7: #{tpu_custom_call.1} parent=1 // loop_footer_branch
      %19 = sbr.rel target = $region3
    $region8: #{tpu_custom_call.1} parent=1 // loop_exit
      _
    %507 = vsyncpa [#allocation3], 1
    %s508 = scalar_lea.sflag [#allocation3], 1
    %509 = vsyncpa %s508, 1
    %510 = vsyncpa [#allocation6], 1
    %511 = vsyncpa [#allocation9], 1
    %512 = vsyncpa [#allocation4], 1
    %s513 = scalar_lea.sflag [#allocation4], 1
    %514 = vsyncpa %s513, 1

</llo_original>
